<compile_context>
chip_gen: v5e
topology: v5e:2x2
jax: 0.10.0
libtpu: 0.0.40
codegen_flags: <defaults>
</compile_context>

<pallas_src>
import functools
import math

import jax
import jax.numpy as jnp
from jax import lax
from jax.experimental import pallas as pl
from jax.experimental.pallas import tpu as pltpu


def _arcface_kernel(labels_ref, cos_ref, loss_ref,
                    m_ref, l_ref, t_ref, *,
                    scale, cos_m, sin_m, num_classes, block_c):
    # labels_ref: (tB, 1) int32 VMEM
    # cos_ref:    (tB, tC) input-dtype VMEM tile (class block k of row block i)
    # loss_ref:   (tB, 1) f32 VMEM (per-row NLL, written at the last class step)
    # m_ref/l_ref/t_ref: (tB, 1) f32 scratch: running max / running exp-sum /
    #                    target logit.
    k = pl.program_id(1)
    nk = pl.num_programs(1)

    @pl.when(k == 0)
    def _():
        m_ref[...] = jnp.full_like(m_ref, -jnp.inf)
        l_ref[...] = jnp.zeros_like(l_ref)
        t_ref[...] = jnp.zeros_like(t_ref)

    # Full-tile clamp: matches torch.clamp(cos_theta, -1, 1) in the reference,
    # which clamps every class column (not just the target one).
    cos = jnp.clip(cos_ref[...].astype(jnp.float32), -1.0, 1.0)   # (tB, tC)
    labels = labels_ref[...]                                      # (tB, 1)

    # Tile-local column index vs. per-row shifted label: the k*block_c shift is
    # a (tB,1) scalar subtract instead of a full-tile add.
    local_label = labels - k * block_c                            # (tB, 1)
    iota = lax.broadcasted_iota(jnp.int32, cos.shape, 1)          # (tB, tC)
    is_tgt = iota == local_label                                  # (tB, tC)

    # Gather the label-column cosine (0 if the label is not in this tile) and
    # apply the additive-angle identity only on that (tB,1) vector:
    #   cos(theta + m) = cos(theta)cos(m) - sin(theta)sin(m),
    #   sin(theta) = sqrt(1 - cos^2(theta))   (theta in [0, pi]).
    tgt_cos = jnp.sum(jnp.where(is_tgt, cos, 0.0), axis=-1, keepdims=True)
    sin_t = jnp.sqrt(jnp.maximum(1.0 - tgt_cos * tgt_cos, 0.0))
    adj = tgt_cos * cos_m - sin_t * sin_m                         # (tB, 1)

    # Accumulate the target logit: cheap (tB,1) test of whether the label
    # falls inside this class tile.
    in_tile = jnp.logical_and(local_label >= 0, local_label < block_c)
    t_ref[...] += in_tile.astype(jnp.float32) * adj * scale

    # Splice the margin-adjusted value into the label column and scale.
    logits = jnp.where(is_tgt, adj, cos) * scale                  # (tB, tC)

    def accumulate(lg):
        # Online (flash-style) logsumexp accumulation.
        row_max = jnp.max(lg, axis=-1, keepdims=True)
        m_new = jnp.maximum(m_ref[...], row_max)
        alpha = jnp.exp(m_ref[...] - m_new)
        l_ref[...] = alpha * l_ref[...] + jnp.sum(jnp.exp(lg - m_new),
                                                  axis=-1, keepdims=True)
        m_ref[...] = m_new

    rem = num_classes % block_c   # static: class padding exists only if != 0
    if rem == 0:
        accumulate(logits)
    else:
        is_last = k == nk - 1

        @pl.when(jnp.logical_not(is_last))
        def _():
            accumulate(logits)

        @pl.when(is_last)
        def _():
            # Mask padded class lanes so they contribute nothing to logsumexp.
            accumulate(jnp.where(iota < rem, logits, -jnp.inf))

    @pl.when(k == nk - 1)
    def _():
        # Per-row cross entropy: logsumexp(logits) - logits[label].
        loss_ref[...] = m_ref[...] + jnp.log(l_ref[...]) - t_ref[...]


def arcface_loss(cos_theta, labels, scale=64.0, margin=0.5,
                 block_b=256, block_c=4096):
    """ArcFace loss: mean cross entropy over margin-adjusted, scaled cosines.

    `margin` is in radians, exactly as in the reference nn.Module.
    block_b must be a multiple of 8, block_c a multiple of 128.
    """
    B, C = cos_theta.shape
    tC = C if C <= block_c else block_c
    tB = B if B <= block_b else block_b
    # v7x megacore: make sure the "parallel" batch axis has >= 2 grid points
    # whenever the batch can be split on an 8-row boundary, so both
    # TensorCores get work.
    if pl.cdiv(B, tB) < 2 and B >= 16:
        tB = (((B + 1) // 2) + 7) // 8 * 8

    labels_2d = labels.astype(jnp.int32).reshape(B, 1)

    kernel = functools.partial(
        _arcface_kernel,
        scale=float(scale),
        cos_m=float(math.cos(margin)),
        sin_m=float(math.sin(margin)),
        num_classes=C,
        block_c=tC,
    )

    # Double-buffered input tile + ~5 f32 tiles of elementwise temporaries,
    # floored at 16 MiB and capped at 48 MiB (inside v7x's 64 MiB physical
    # VMEM; lifts v5e/v6e's 16/32 MiB scoped defaults for the large tiles).
    elem = jnp.dtype(cos_theta.dtype).itemsize
    vmem_limit = int(min(48 * 1024 * 1024,
                         max(16 * 1024 * 1024,
                             2 * tB * tC * elem + 5 * tB * tC * 4
                             + 2 * 1024 * 1024)))

    per_row = pl.pallas_call(
        kernel,
        out_shape=jax.ShapeDtypeStruct((B, 1), jnp.float32),
        grid_spec=pltpu.PrefetchScalarGridSpec(
            num_scalar_prefetch=0,
            grid=(pl.cdiv(B, tB), pl.cdiv(C, tC)),
            in_specs=[
                pl.BlockSpec((tB, 1), lambda i, k: (i, 0)),    # labels
                pl.BlockSpec((tB, tC), lambda i, k: (i, k)),   # cos_theta
            ],
            out_specs=pl.BlockSpec((tB, 1), lambda i, k: (i, 0)),
            scratch_shapes=[
                pltpu.VMEM((tB, 1), jnp.float32),   # running max
                pltpu.VMEM((tB, 1), jnp.float32),   # running exp-sum
                pltpu.VMEM((tB, 1), jnp.float32),   # target logit
            ],
        ),
        compiler_params=pltpu.CompilerParams(
            dimension_semantics=("parallel", "arbitrary"),
            vmem_limit_bytes=vmem_limit,
        ),
    )(labels_2d, cos_theta)

    # reduction='mean' of nn.CrossEntropyLoss.
    return jnp.mean(per_row)


def _arcface_ref(cos_theta, labels, scale=64.0, margin=0.5):
    """Pure-JAX reference mirroring the PyTorch module."""
    C = cos_theta.shape[1]
    cos = jnp.clip(cos_theta.astype(jnp.float32), -1.0, 1.0)
    theta = jnp.arccos(cos)
    one_hot = jax.nn.one_hot(labels, C, dtype=jnp.float32)
    target = jnp.cos(theta + margin)
    logits = (cos * (1.0 - one_hot) + target * one_hot) * scale
    lse = jax.nn.logsumexp(logits, axis=-1)
    tgt = jnp.sum(logits * one_hot, axis=-1)
    return jnp.mean(lse - tgt)


if __name__ == "__main__":
    key = jax.random.PRNGKey(0)
    k1, k2, k3, k4 = jax.random.split(key, 4)

    # Case 1: single-tile small shape (batch=8 samples, 128 classes).
    B1, C1 = 8, 128
    cos1 = jax.random.uniform(k1, (B1, C1), jnp.float32, minval=-1.0, maxval=1.0)
    lab1 = jax.random.randint(k2, (B1,), 0, C1, dtype=jnp.int32)
    loss1 = arcface_loss(cos1, lab1, scale=64.0, margin=0.5)
    jax.block_until_ready(loss1)
    ref1 = _arcface_ref(cos1, lab1, scale=64.0, margin=0.5)

    # Case 2: multi-tile grid with a ragged class axis (exercises the online
    # logsumexp, the 2-row-block split, and the masked last class tile).
    B2, C2 = 16, 320
    cos2 = jax.random.uniform(k3, (B2, C2), jnp.float32, minval=-1.0, maxval=1.0)
    lab2 = jax.random.randint(k4, (B2,), 0, C2, dtype=jnp.int32)
    loss2 = arcface_loss(cos2, lab2, scale=64.0, margin=0.5,
                         block_b=8, block_c=128)
    jax.block_until_ready(loss2)
    ref2 = _arcface_ref(cos2, lab2, scale=64.0, margin=0.5)

    for got, want in ((loss1, ref1), (loss2, ref2)):
        err = abs(float(got) - float(want))
        assert err < 1e-2 * max(1.0, abs(float(want))), (float(got), float(want))

    print("KERNEL_OK")
</pallas_src>

<mosaic_0001>
module attributes {stable_mosaic.version = 11 : i64} {
  func.func @_arcface_kernel(%arg0: i32, %arg1: i32, %arg2: memref<8x1xi32, #tpu.memory_space<vmem>>, %arg3: memref<8x128xf32, #tpu.memory_space<vmem>>, %arg4: memref<8x1xf32, #tpu.memory_space<vmem>>, %arg5: memref<8x1xf32, #tpu.memory_space<vmem>>, %arg6: memref<8x1xf32, #tpu.memory_space<vmem>>, %arg7: memref<8x1xf32, #tpu.memory_space<vmem>>) attributes {dimension_semantics = [#tpu.dimension_semantics<parallel>, #tpu.dimension_semantics<arbitrary>], iteration_bounds = array<i64: 1, 1>, scalar_prefetch = 0 : i64, scratch_operands = 3 : i64, tpu.core_type = #tpu.core_type<tc>, window_params = [{transform_indices = @transform_0, window_bounds = array<i64: 8, 1>}, {transform_indices = @transform_1, window_bounds = array<i64: 8, 128>}, {transform_indices = @transform_2, window_bounds = array<i64: 8, 1>}]} {
    %c0_i32 = arith.constant 0 : i32
    %0 = arith.cmpi eq, %arg1, %c0_i32 : i32
    %1 = arith.extui %0 : i1 to i32
    %c0_i32_0 = arith.constant 0 : i32
    %2 = arith.cmpi ne, %1, %c0_i32_0 : i32
    scf.if %2 {
      %cst_33 = arith.constant 0xFF800000 : f32
      %68 = vector.broadcast %cst_33 : f32 to vector<8x1xf32>
      %c0_34 = arith.constant 0 : index
      %c0_35 = arith.constant 0 : index
      %69 = vector.load %arg5[%c0_34, %c0_35] : memref<8x1xf32, #tpu.memory_space<vmem>>, vector<8x1xf32>
      tpu.vector_store %arg5[%c0_34, %c0_35], %68 {strides = array<i32>} : memref<8x1xf32, #tpu.memory_space<vmem>>, vector<8x1xf32>,
      %cst_36 = arith.constant 0.000000e+00 : f32
      %70 = vector.broadcast %cst_36 : f32 to vector<8x1xf32>
      %c0_37 = arith.constant 0 : index
      %c0_38 = arith.constant 0 : index
      %71 = vector.load %arg6[%c0_37, %c0_38] : memref<8x1xf32, #tpu.memory_space<vmem>>, vector<8x1xf32>
      tpu.vector_store %arg6[%c0_37, %c0_38], %70 {strides = array<i32>} : memref<8x1xf32, #tpu.memory_space<vmem>>, vector<8x1xf32>,
      %cst_39 = arith.constant 0.000000e+00 : f32
      %72 = vector.broadcast %cst_39 : f32 to vector<8x1xf32>
      %c0_40 = arith.constant 0 : index
      %c0_41 = arith.constant 0 : index
      %73 = vector.load %arg7[%c0_40, %c0_41] : memref<8x1xf32, #tpu.memory_space<vmem>>, vector<8x1xf32>
      tpu.vector_store %arg7[%c0_40, %c0_41], %72 {strides = array<i32>} : memref<8x1xf32, #tpu.memory_space<vmem>>, vector<8x1xf32>,
    } else {
    }
    %c0 = arith.constant 0 : index
    %c0_1 = arith.constant 0 : index
    %3 = vector.load %arg3[%c0, %c0_1] : memref<8x128xf32, #tpu.memory_space<vmem>>, vector<8x128xf32>
    %cst = arith.constant -1.000000e+00 : f32
    %cst_2 = arith.constant 1.000000e+00 : f32
    %4 = vector.broadcast %cst : f32 to vector<8x128xf32>
    %5 = arith.maximumf %4, %3 : vector<8x128xf32>
    %6 = vector.broadcast %cst_2 : f32 to vector<8x128xf32>
    %7 = arith.minimumf %6, %5 : vector<8x128xf32>
    %c0_3 = arith.constant 0 : index
    %c0_4 = arith.constant 0 : index
    %8 = vector.load %arg2[%c0_3, %c0_4] : memref<8x1xi32, #tpu.memory_space<vmem>>, vector<8x1xi32>
    %c128_i32 = arith.constant 128 : i32
    %9 = arith.muli %arg1, %c128_i32 : i32
    %10 = vector.broadcast %9 : i32 to vector<8x1xi32>
    %11 = arith.subi %8, %10 : vector<8x1xi32>
    %12 = tpu.iota {dimensions = array<i32: 1>} : vector<8x128xi32>
    %13 = vector.broadcast %11 : vector<8x1xi32> to vector<8x128xi32>
    %14 = arith.cmpi eq, %12, %13 : vector<8x128xi32>
    %cst_5 = arith.constant 0.000000e+00 : f32
    %15 = vector.broadcast %cst_5 : f32 to vector<8x128xf32>
    %16 = arith.select %14, %7, %15 : vector<8x128xi1>, vector<8x128xf32>
    %cst_6 = arith.constant dense<0.000000e+00> : vector<8xf32>
    %17 = vector.multi_reduction <add>, %16, %cst_6 [1] : vector<8x128xf32> to vector<8xf32>
    %18 = vector.shape_cast %17 : vector<8xf32> to vector<8x1xf32>
    %19 = arith.mulf %18, %18 : vector<8x1xf32>
    %cst_7 = arith.constant 1.000000e+00 : f32
    %20 = vector.broadcast %cst_7 : f32 to vector<8x1xf32>
    %21 = arith.subf %20, %19 : vector<8x1xf32>
    %cst_8 = arith.constant 0.000000e+00 : f32
    %22 = vector.broadcast %cst_8 : f32 to vector<8x1xf32>
    %23 = arith.maximumf %21, %22 : vector<8x1xf32>
    %24 = math.sqrt %23 : vector<8x1xf32>
    %cst_9 = arith.constant 0.87758255 : f32
    %25 = vector.broadcast %cst_9 : f32 to vector<8x1xf32>
    %26 = arith.mulf %18, %25 : vector<8x1xf32>
    %cst_10 = arith.constant 0.47942555 : f32
    %27 = vector.broadcast %cst_10 : f32 to vector<8x1xf32>
    %28 = arith.mulf %24, %27 : vector<8x1xf32>
    %29 = arith.subf %26, %28 : vector<8x1xf32>
    %c0_i32_11 = arith.constant 0 : i32
    %30 = vector.broadcast %c0_i32_11 : i32 to vector<8x1xi32>
    %31 = arith.cmpi sge, %11, %30 : vector<8x1xi32>
    %c128_i32_12 = arith.constant 128 : i32
    %32 = vector.broadcast %c128_i32_12 : i32 to vector<8x1xi32>
    %33 = arith.cmpi slt, %11, %32 : vector<8x1xi32>
    %34 = arith.andi %31, %33 : vector<8x1xi1>
    %c0_13 = arith.constant 0 : index
    %c0_14 = arith.constant 0 : index
    %35 = vector.load %arg7[%c0_13, %c0_14] : memref<8x1xf32, #tpu.memory_space<vmem>>, vector<8x1xf32>
    %36 = arith.extui %34 : vector<8x1xi1> to vector<8x1xi32>
    %37 = arith.sitofp %36 : vector<8x1xi32> to vector<8x1xf32>
    %38 = arith.mulf %37, %29 : vector<8x1xf32>
    %cst_15 = arith.constant 6.400000e+01 : f32
    %39 = vector.broadcast %cst_15 : f32 to vector<8x1xf32>
    %40 = arith.mulf %38, %39 : vector<8x1xf32>
    %41 = arith.addf %35, %40 : vector<8x1xf32>
    %c0_16 = arith.constant 0 : index
    %c0_17 = arith.constant 0 : index
    %42 = vector.load %arg7[%c0_16, %c0_17] : memref<8x1xf32, #tpu.memory_space<vmem>>, vector<8x1xf32>
    tpu.vector_store %arg7[%c0_16, %c0_17], %41 {strides = array<i32>} : memref<8x1xf32, #tpu.memory_space<vmem>>, vector<8x1xf32>,
    %43 = vector.shape_cast %29 : vector<8x1xf32> to vector<8x1xf32>
    %44 = vector.broadcast %43 : vector<8x1xf32> to vector<8x128xf32>
    %45 = arith.select %14, %44, %7 : vector<8x128xi1>, vector<8x128xf32>
    %cst_18 = arith.constant 6.400000e+01 : f32
    %46 = vector.broadcast %cst_18 : f32 to vector<8x128xf32>
    %47 = arith.mulf %45, %46 : vector<8x128xf32>
    %cst_19 = arith.constant dense<0xFF800000> : vector<8xf32>
    %48 = vector.multi_reduction <maximumf>, %47, %cst_19 [1] : vector<8x128xf32> to vector<8xf32>
    %49 = vector.shape_cast %48 : vector<8xf32> to vector<8x1xf32>
    %c0_20 = arith.constant 0 : index
    %c0_21 = arith.constant 0 : index
    %50 = vector.load %arg5[%c0_20, %c0_21] : memref<8x1xf32, #tpu.memory_space<vmem>>, vector<8x1xf32>
    %51 = arith.maximumf %50, %49 : vector<8x1xf32>
    %c0_22 = arith.constant 0 : index
    %c0_23 = arith.constant 0 : index
    %52 = vector.load %arg5[%c0_22, %c0_23] : memref<8x1xf32, #tpu.memory_space<vmem>>, vector<8x1xf32>
    %53 = arith.subf %52, %51 : vector<8x1xf32>
    %54 = math.exp %53 : vector<8x1xf32>
    %c0_24 = arith.constant 0 : index
    %c0_25 = arith.constant 0 : index
    %55 = vector.load %arg6[%c0_24, %c0_25] : memref<8x1xf32, #tpu.memory_space<vmem>>, vector<8x1xf32>
    %56 = arith.mulf %54, %55 : vector<8x1xf32>
    %57 = vector.broadcast %51 : vector<8x1xf32> to vector<8x128xf32>
    %58 = arith.subf %47, %57 : vector<8x128xf32>
    %59 = math.exp %58 : vector<8x128xf32>
    %cst_26 = arith.constant dense<0.000000e+00> : vector<8xf32>
    %60 = vector.multi_reduction <add>, %59, %cst_26 [1] : vector<8x128xf32> to vector<8xf32>
    %61 = vector.shape_cast %60 : vector<8xf32> to vector<8x1xf32>
    %62 = arith.addf %56, %61 : vector<8x1xf32>
    %c0_27 = arith.constant 0 : index
    %c0_28 = arith.constant 0 : index
    %63 = vector.load %arg6[%c0_27, %c0_28] : memref<8x1xf32, #tpu.memory_space<vmem>>, vector<8x1xf32>
    tpu.vector_store %arg6[%c0_27, %c0_28], %62 {strides = array<i32>} : memref<8x1xf32, #tpu.memory_space<vmem>>, vector<8x1xf32>,
    %c0_29 = arith.constant 0 : index
    %c0_30 = arith.constant 0 : index
    %64 = vector.load %arg5[%c0_29, %c0_30] : memref<8x1xf32, #tpu.memory_space<vmem>>, vector<8x1xf32>
    tpu.vector_store %arg5[%c0_29, %c0_30], %51 {strides = array<i32>} : memref<8x1xf32, #tpu.memory_space<vmem>>, vector<8x1xf32>,
    %c0_i32_31 = arith.constant 0 : i32
    %65 = arith.cmpi eq, %arg1, %c0_i32_31 : i32
    %66 = arith.extui %65 : i1 to i32
    %c0_i32_32 = arith.constant 0 : i32
    %67 = arith.cmpi ne, %66, %c0_i32_32 : i32
    scf.if %67 {
      %c0_33 = arith.constant 0 : index
      %c0_34 = arith.constant 0 : index
      %68 = vector.load %arg5[%c0_33, %c0_34] : memref<8x1xf32, #tpu.memory_space<vmem>>, vector<8x1xf32>
      %c0_35 = arith.constant 0 : index
      %c0_36 = arith.constant 0 : index
      %69 = vector.load %arg6[%c0_35, %c0_36] : memref<8x1xf32, #tpu.memory_space<vmem>>, vector<8x1xf32>
      %70 = math.log %69 : vector<8x1xf32>
      %71 = arith.addf %68, %70 : vector<8x1xf32>
      %c0_37 = arith.constant 0 : index
      %c0_38 = arith.constant 0 : index
      %72 = vector.load %arg7[%c0_37, %c0_38] : memref<8x1xf32, #tpu.memory_space<vmem>>, vector<8x1xf32>
      %73 = arith.subf %71, %72 : vector<8x1xf32>
      %c0_39 = arith.constant 0 : index
      %c0_40 = arith.constant 0 : index
      %74 = vector.load %arg4[%c0_39, %c0_40] : memref<8x1xf32, #tpu.memory_space<vmem>>, vector<8x1xf32>
      tpu.vector_store %arg4[%c0_39, %c0_40], %73 {strides = array<i32>} : memref<8x1xf32, #tpu.memory_space<vmem>>, vector<8x1xf32>,
    } else {
    }
    return
  }
  func.func @transform_0(%arg0: i32, %arg1: i32) -> (i32, i32) {
    %c0_i32 = arith.constant 0 : i32
    %c0_i32_0 = arith.constant 0 : i32
    return %arg0, %c0_i32 : i32, i32
  }
  func.func @transform_1(%arg0: i32, %arg1: i32) -> (i32, i32) {
    %c0_i32 = arith.constant 0 : i32
    return %arg0, %arg1 : i32, i32
  }
  func.func @transform_2(%arg0: i32, %arg1: i32) -> (i32, i32) {
    %c0_i32 = arith.constant 0 : i32
    %c0_i32_0 = arith.constant 0 : i32
    return %arg0, %c0_i32 : i32, i32
  }
}

</mosaic_0001>

<llo_original>
// kernel: tpu_custom_call.1
$region0: #{tpu_custom_call.1}
  #allocation0 [shape = 'u32[]', space=smem, size = 0x4, offset = 0x4, fixed_abs, tag = 'smem constant byte address 0x4 - core index']
  #allocation1 [shape = 'u32[72,128]{1,0:T(1,128)}', space=vmem, size = 0x9000, scoped, tag = 'internal scratch']
  #allocation2 [shape = 'f32[8,1]{1,0:T(8,128)}', space=vmem, size = 0x1000, scoped, tag = 'scratch operand']
  #allocation3 [shape = 'f32[8,1]{1,0:T(8,128)}', space=vmem, size = 0x1000, scoped, tag = 'scratch operand']
  #allocation4 [shape = 'f32[8,1]{1,0:T(8,128)}', space=vmem, size = 0x1000, scoped, tag = 'scratch operand']
  %s0 = inlined_call_operand.vmem [shape: s32[8,1], index: 0, kind: input, shape index: {}]
  %s1 = inlined_call_operand.vmem [shape: f32[8,128], index: 1, kind: input, shape index: {}]
  %s2 = inlined_call_operand.vmem [shape: f32[8,1], index: 2, kind: output, shape index: {}]
  %s3 = sld [smem:[#allocation0]]
  $region26: #{tpu_custom_call.1} parent=0
    _
  %s5 = ssub.s32 1, %s3
  %s6 = scalar_select 0, %s5, %s3
  // Predicated region
  $region2: #{tpu_custom_call.1} parent=0 // pred_check
    _
  $region3: #{tpu_custom_call.1} parent=0 // pred_check_branch
    %8 = sbr.rel (0) target = $region5
  $region4: #{tpu_custom_call.1} parent=0 // pred_region
    _
  $region5: #{tpu_custom_call.1} parent=0 // pred_fallthru
    _
  // Predicated region
  $region6: #{tpu_custom_call.1} parent=0 // pred_check
    _
  $region7: #{tpu_custom_call.1} parent=0 // pred_check_branch
    %10 = sbr.rel (0) target = $region9
  $region8: #{tpu_custom_call.1} parent=0 // pred_region
    _
  $region9: #{tpu_custom_call.1} parent=0 // pred_fallthru
    _
  %p11 = scmp.eq.s32.totalorder 0, 0
  // Predicated region
  $region10: #{tpu_custom_call.1} parent=0 // pred_check
    %p12 = pneg %p11
  $region11: #{tpu_custom_call.1} parent=0 // pred_check_branch
    %14 = sbr.rel (%p12) target = $region13
  $region12: #{tpu_custom_call.1} parent=0 // pred_region
    %vm15 = vcmask 7168
    %16 = vst.msk [vmem:[#allocation2] sm:$0xff] %vm15, -inf
    %17 = vst.msk [vmem:[#allocation3] sm:$0xff] %vm15, 0.0
    %18 = vst.msk [vmem:[#allocation4] sm:$0xff] %vm15, 0.0
  $region13: #{tpu_custom_call.1} parent=0 // pred_fallthru
    _
  %v19 = vld [vmem:[%s1] sm:$0xff]
  %v20 = vmax.f32 %v19, -1.0
  %v21 = vmin.f32 %v20, 1.0
  %v22 = vld [vmem:[%s0] sm:$0xff]
  %s23 = smul.u32 0, 128
  %v24 = vstv %s23
  %v25 = vsub.s32 %v22, %v24
  %v26 = vlaneseq
  %v27 = vand.u32 %v26, 127
  %28 = vset.pattern.permute.xlu0 0
  %29 = vperm.xlu0 %28, %v25
  %v30 = vpop.permute.xlu0 %29
  %vm31 = vcmp.eq.s32.totalorder %v27, %v30
  %v32 = vsel %vm31, %v21, 0.0
  %33 = vadd.xlane.f32.xlu0 %v32
  %v34 = vpop.xlane.xlu0 %33
  %v35 = vmul.f32 %v34, %v34
  %v36 = vsub.f32 1.0, %v35
  %v37 = vmax.f32 %v36, 0.0
  %v38 = vrsqrt.pop %v37
  %v39 = vmul.f32 %v38, %v37
  %v40 = vmul.f32 %v39, %v38
  %v41 = vmul.f32 0.5, %v40
  %v42 = vsub.f32 1.5, %v41
  %v43 = vmul.f32 %v38, %v42
  %v44 = vmul.f32 %v37, %v43
  %vm45 = vcmp.eq.f32.partialorder %v37, inf
  %v46 = vsel %vm45, %v37, %v44
  %vm47 = vcmp.eq.f32.partialorder %v37, 0.0
  %v48 = vand.u32 %v37, 2147483648
  %v49 = vsel %vm47, %v48, %v46
  %v50 = vmul.f32 %v34, 0.87758255
  %v51 = vmul.f32 %v49, 0.47942555
  %v52 = vsub.f32 %v50, %v51
  %vm53 = vcmp.ge.s32.totalorder %v25, 0
  %vm54 = vcmp.lt.s32.totalorder %v25, 128
  %vm55 = vmand %vm53, %vm54
  %v56 = vld [vmem:[#allocation4] sm:$0xff]
  %v57 = vsel %vm55, 1, 0
  %v58 = vcvt.s32.f32 %v57
  %v59 = vmul.f32 %v58, %v52
  %v60 = vmul.f32 %v59, 64.0
  %v61 = vadd.f32 %v56, %v60
  %vm62 = vcmask 7168
  %63 = vst.msk [vmem:[#allocation4] sm:$0xff] %vm62, %v61
  %v64 = vsel %vm31, %v52, %v21
  %v65 = vmul.f32 %v64, 64.0
  %66 = vmax.xlane.f32.xlu0 %v65
  %v67 = vpop.xlane.xlu0 %66
  %v68 = vld [vmem:[#allocation2] sm:$0xff]
  %v69 = vmax.f32 %v68, %v67
  %v70 = vsub.f32 %v68, %v69
  %v71 = vmul.f32 %v70, 1.442695
  %v72 = vpow.pop %v71
  %v73 = vld [vmem:[#allocation3] sm:$0xff]
  %v74 = vmul.f32 %v72, %v73
  %76 = vset.pattern.permute.xlu0 0
  %77 = vperm.xlu0 %76, %v69
  %v78 = vpop.permute.xlu0 %77
  %v80 = vsub.f32 %v65, %v78
  %v81 = vmul.f32 %v80, 1.442695
  %v82 = vpow.pop %v81
  %83 = vadd.xlane.f32.xlu0 %v82
  %v84 = vpop.xlane.xlu0 %83
  %v85 = vadd.f32 %v74, %v84
  %86 = vst.msk [vmem:[#allocation3] sm:$0xff] %vm62, %v85
  %87 = vst.msk [vmem:[#allocation2] sm:$0xff] %vm62, %v69
  // Predicated region
  $region14: #{tpu_custom_call.1} parent=0 // pred_check
    %p88 = pneg %p11
  $region15: #{tpu_custom_call.1} parent=0 // pred_check_branch
    %90 = sbr.rel (%p88) target = $region17
  $region16: #{tpu_custom_call.1} parent=0 // pred_region
    %v91 = vld [vmem:[#allocation2] sm:$0xff]
    %v92 = vld [vmem:[#allocation3] sm:$0xff]
    %v93 = vlog2.pop %v92
    %v94 = vmul.f32 %v93, 0.6931472
    %v95 = vadd.f32 %v91, %v94
    %v96 = vld [vmem:[#allocation4] sm:$0xff]
    %v97 = vsub.f32 %v95, %v96
    %98 = vst.msk [vmem:[%s2] sm:$0xff] %vm62, %v97
  $region17: #{tpu_custom_call.1} parent=0 // pred_fallthru
    _
  // Predicated region
  $region18: #{tpu_custom_call.1} parent=0 // pred_check
    _
  $region19: #{tpu_custom_call.1} parent=0 // pred_check_branch
    %100 = sbr.rel (0) target = $region21
  $region20: #{tpu_custom_call.1} parent=0 // pred_region
    _
  $region21: #{tpu_custom_call.1} parent=0 // pred_fallthru
    _
  // Predicated region
  $region22: #{tpu_custom_call.1} parent=0 // pred_check
    _
  $region23: #{tpu_custom_call.1} parent=0 // pred_check_branch
    %102 = sbr.rel (0) target = $region25
  $region24: #{tpu_custom_call.1} parent=0 // pred_region
    _
  $region25: #{tpu_custom_call.1} parent=0 // pred_fallthru
    _

</llo_original>
